<compile_context>
chip_gen: v6e
topology: v6e:2x2x1
jax: 0.10.0
libtpu: 0.0.40
codegen_flags: <defaults>
</compile_context>

<pallas_src>
import functools

import jax
import jax.numpy as jnp
from jax.experimental import pallas as pl
from jax.experimental.pallas import tpu as pltpu

H1, H2 = 128, 256        # hidden widths of the Critic MLP
_MAX_BB = 2048           # hard cap on the batch tile
_MAX_TK = 2048           # hard cap on the input_dim (K) tile


def _round_down(x, m):
    return (x // m) * m


def _round_up(x, m):
    return (x + m - 1) // m * m


def _vmem_budget_bytes():
    """Per-generation VMEM budget for this kernel (~half of physical VMEM).

    v5e/v6e (128 MiB physical) -> 64 MiB;  v7x (64 MiB physical) -> 32 MiB.
    """
    try:
        cap = int(pltpu.get_tpu_info().vmem_capacity_bytes)
    except Exception:  # fallback if the query is unavailable
        cap = 64 * 1024 * 1024
    return max(16 * 1024 * 1024, min(cap // 2, 64 * 1024 * 1024))


def _pick_tiles(B, D, x_itemsize, budget, bb_cap=_MAX_BB, tk_cap=_MAX_TK):
    """Choose (bb, tk): batch tile and input_dim (K-reduction) tile."""
    # K tile: only tile D when it is large AND a 128-multiple divisor exists,
    # so tk divides D exactly (a ragged K tile would feed garbage into the
    # layer-1 reduction). Otherwise a single K step with tk == D.
    tk = D
    if D > tk_cap and D % 128 == 0:
        for cand in (2048, 1024, 512, 256, 128):
            if cand <= tk_cap and D % cand == 0:
                tk = cand
                break

    # Batch tile from the VMEM budget (20% headroom for compiler temporaries).
    usable = int(budget * 0.8)
    w1_bufs = 1 if tk == D else 2                            # constant vs K-pipelined
    fixed = (w1_bufs * tk * H1 * 2                           # w1 (bf16)
             + H1 * 4 + H1 * H2 * 2 + H2 * 4 + H2 * 4 + 4)   # b1, w2, b2, w3, b3
    per_row = (2 * tk * x_itemsize                           # x double buffer
               + H1 * 4                                      # f32 layer-1 accumulator
               + H2 * 4                                      # f32 h2 temporary
               + 2 * 128 * 4)                                # lane-padded (bb,1) out bufs
    room = max(usable - fixed, 0) // per_row
    if room >= 128:
        bb = min(_MAX_BB, _round_down(room, 128))
    else:
        bb = max(8, _round_down(max(room, 8), 8))
    bb = min(bb, max(8, _round_down(bb_cap, 8)))

    # Clamp to the batch. Block second-to-last dim must be a multiple of 8 or
    # equal the full dim; the ragged last tile is handled by the cdiv grid.
    if B <= 8:
        bb = B
    else:
        bb_full = _round_down(B, 8)          # largest multiple-of-8 block <= B
        if bb >= bb_full:
            if B >= 256:
                # Split into ~2 even tiles so both v7x TensorCores get work.
                bb = min(bb_full, _round_up(_round_up(B, 2) // 2, 8))
            else:
                bb = bb_full
    return bb, tk


def _critic_kernel(x_ref, w1_ref, b1_ref, w2_ref, b2_ref, w3_ref, b3_ref,
                   o_ref, acc_ref):
    # x_ref : (bb, tk)  f32/bf16      w1_ref: (tk, 128)  bf16
    # b1_ref: (1, 128)  f32           w2_ref: (128, 256) bf16
    # b2_ref: (1, 256)  f32           w3_ref: (1, 256)   f32
    # b3_ref: (1, 1)    f32           o_ref : (bb, 1)    f32
    # acc_ref: (bb, 128) f32 scratch  (layer-1 accumulator over the K axis)
    k = pl.program_id(1)

    @pl.when(k == 0)
    def _():
        acc_ref[...] = jnp.zeros_like(acc_ref)

    # Layer-1 partial product on the MXU: bf16 inputs, f32 accumulation.
    x = x_ref[...].astype(jnp.bfloat16)
    acc_ref[...] += jnp.dot(x, w1_ref[...], preferred_element_type=jnp.float32)

    @pl.when(k == pl.num_programs(1) - 1)
    def _():
        h1 = jnp.maximum(acc_ref[...] + b1_ref[...], 0.0)
        h2 = jnp.dot(h1.astype(jnp.bfloat16), w2_ref[...],
                     preferred_element_type=jnp.float32) + b2_ref[...]
        h2 = jnp.maximum(h2, 0.0)
        # Final 256->1 layer on the VPU/XLU (multiply + lane reduce) instead of
        # an N=1 MXU matmul.
        out = jnp.sum(h2 * w3_ref[...], axis=-1, keepdims=True) + b3_ref[...]
        o_ref[...] = out.astype(o_ref.dtype)


@functools.partial(
    jax.jit,
    static_argnames=("max_block_b", "max_block_k", "core_parallel_batch"))
def critic_forward(x, params, *, max_block_b=_MAX_BB, max_block_k=_MAX_TK,
                   core_parallel_batch=True):
    """Critic MLP forward. x: (B, D) f32 or bf16; returns (B, 1) f32."""
    w1, b1, w2, b2, w3, b3 = params
    B, D = x.shape

    budget = _vmem_budget_bytes()
    bb, tk = _pick_tiles(B, D, x.dtype.itemsize, budget, max_block_b, max_block_k)
    nb = -(-B // bb)          # ceil(B / bb): ragged last tile handled by Pallas
    nk = D // tk              # tk divides D exactly (or tk == D)

    # bf16 weights for the two MXU matmuls (cast once; tiny vs x traffic).
    w1b = w1.astype(jnp.bfloat16)
    w2b = w2.astype(jnp.bfloat16)
    w3r = jnp.asarray(w3, jnp.float32).reshape(1, H2)
    b1r = jnp.asarray(b1, jnp.float32).reshape(1, H1)
    b2r = jnp.asarray(b2, jnp.float32).reshape(1, H2)
    b3r = jnp.asarray(b3, jnp.float32).reshape(1, 1)

    const = pl.Buffered(1)    # grid-constant blocks need no double buffer

    def rep(shape):
        return pl.BlockSpec(shape, lambda i, k: (0, 0), pipeline_mode=const)

    if nk == 1:
        w1_spec = rep((tk, H1))                                  # constant block
    else:
        w1_spec = pl.BlockSpec((tk, H1), lambda i, k: (k, 0))    # K-pipelined

    if nb >= 2:
        # Shard batch tiles across TensorCores (v7x); PARALLEL as fallback.
        batch_sem = pltpu.CORE_PARALLEL if core_parallel_batch else pltpu.PARALLEL
    else:
        batch_sem = pltpu.ARBITRARY

    return pl.pallas_call(
        _critic_kernel,
        out_shape=jax.ShapeDtypeStruct((B, 1), jnp.float32),
        grid_spec=pltpu.PrefetchScalarGridSpec(
            num_scalar_prefetch=0,
            grid=(nb, nk),
            in_specs=[
                pl.BlockSpec((bb, tk), lambda i, k: (i, k)),     # x
                w1_spec,                                         # w1
                rep((1, H1)),                                    # b1
                rep((H1, H2)),                                   # w2
                rep((1, H2)),                                    # b2
                rep((1, H2)),                                    # w3 (row)
                rep((1, 1)),                                     # b3
            ],
            out_specs=pl.BlockSpec((bb, 1), lambda i, k: (i, 0)),
            scratch_shapes=[pltpu.VMEM((bb, H1), jnp.float32)],
        ),
        compiler_params=pltpu.CompilerParams(
            dimension_semantics=(batch_sem, pltpu.ARBITRARY),
            vmem_limit_bytes=budget,
        ),
    )(x, w1b, b1r, w2b, b2r, w3r, b3r)


def init_critic_params(key, input_dim):
    """Deterministic init mimicking nn.Linear default (U(-1/sqrt(fan_in), +))."""
    dims = [(input_dim, H1), (H1, H2), (H2, 1)]
    params = []
    for fan_in, fan_out in dims:
        key, kw, kb = jax.random.split(key, 3)
        bound = 1.0 / jnp.sqrt(float(fan_in))
        w = jax.random.uniform(kw, (fan_in, fan_out), jnp.float32, -bound, bound)
        b = jax.random.uniform(kb, (1, fan_out), jnp.float32, -bound, bound)
        params.extend([w, b])
    return tuple(params)


def critic_reference(x, params, *, matmul_dtype=jnp.float32):
    """Pure-JAX reference. matmul_dtype=bfloat16 mirrors the kernel numerics."""
    w1, b1, w2, b2, w3, b3 = params

    def mm(a, w):
        return jnp.dot(a.astype(matmul_dtype), w.astype(matmul_dtype),
                       preferred_element_type=jnp.float32)

    h1 = jnp.maximum(mm(x, w1) + b1, 0.0)
    h2 = jnp.maximum(mm(h1, w2) + b2, 0.0)
    return h2 @ w3 + b3


if __name__ == "__main__":
    key = jax.random.PRNGKey(0)
    k_params, k_x = jax.random.split(key)

    # Case 1: nominal small shape (exact batch tile, single K step).
    batch, input_dim = 8, 32
    params = init_critic_params(k_params, input_dim)
    x = jax.random.normal(k_x, (batch, input_dim), jnp.float32)
    out = jax.block_until_ready(critic_forward(x, params))
    assert out.shape == (batch, 1), out.shape
    ref_mixed = critic_reference(x, params, matmul_dtype=jnp.bfloat16)
    assert jnp.allclose(out, ref_mixed, atol=2e-3, rtol=2e-3), \
        "mismatch vs mixed-precision reference"
    ref_f32 = critic_reference(x, params)
    assert jnp.allclose(out, ref_f32, atol=5e-2, rtol=5e-2), \
        "mismatch vs f32 reference"

    # Case 2: ragged batch (exercises cdiv grid + masked last tile, 2 tiles).
    x2 = jax.random.normal(jax.random.PRNGKey(1), (10, input_dim), jnp.float32)
    out2 = jax.block_until_ready(critic_forward(x2, params))
    ref2 = critic_reference(x2, params, matmul_dtype=jnp.bfloat16)
    assert out2.shape == (10, 1), out2.shape
    assert jnp.allclose(out2, ref2, atol=2e-3, rtol=2e-3), \
        "mismatch on ragged-batch path"

    # Case 3: K-tiled layer-1 reduction path (forced small tk).
    input_dim3 = 256
    params3 = init_critic_params(jax.random.PRNGKey(2), input_dim3)
    x3 = jax.random.normal(jax.random.PRNGKey(3), (16, input_dim3), jnp.float32)
    out3 = jax.block_until_ready(critic_forward(x3, params3, max_block_k=128))
    ref3 = critic_reference(x3, params3, matmul_dtype=jnp.bfloat16)
    assert out3.shape == (16, 1), out3.shape
    assert jnp.allclose(out3, ref3, atol=2e-3, rtol=2e-3), \
        "mismatch on K-tiled path"

    print("KERNEL_OK")
</pallas_src>

<mosaic_0001>
module attributes {stable_mosaic.version = 11 : i64} {
  func.func @_critic_kernel(%arg0: i32, %arg1: i32, %arg2: memref<8x32xf32, #tpu.memory_space<vmem>>, %arg3: memref<32x128xbf16, #tpu.memory_space<vmem>>, %arg4: memref<1x128xf32, #tpu.memory_space<vmem>>, %arg5: memref<128x256xbf16, #tpu.memory_space<vmem>>, %arg6: memref<1x256xf32, #tpu.memory_space<vmem>>, %arg7: memref<1x256xf32, #tpu.memory_space<vmem>>, %arg8: memref<1x1xf32, #tpu.memory_space<vmem>>, %arg9: memref<8x1xf32, #tpu.memory_space<vmem>>, %arg10: memref<8x128xf32, #tpu.memory_space<vmem>>) attributes {dimension_semantics = [#tpu.dimension_semantics<arbitrary>, #tpu.dimension_semantics<arbitrary>], iteration_bounds = array<i64: 1, 1>, scalar_prefetch = 0 : i64, scratch_operands = 1 : i64, tpu.core_type = #tpu.core_type<tc>, window_params = [{transform_indices = @transform_0, window_bounds = array<i64: 8, 32>}, {pipeline_mode = #tpu.pipeline_mode<synchronous>, transform_indices = @transform_1, window_bounds = array<i64: 32, 128>}, {pipeline_mode = #tpu.pipeline_mode<synchronous>, transform_indices = @transform_2, window_bounds = array<i64: 1, 128>}, {pipeline_mode = #tpu.pipeline_mode<synchronous>, transform_indices = @transform_3, window_bounds = array<i64: 128, 256>}, {pipeline_mode = #tpu.pipeline_mode<synchronous>, transform_indices = @transform_4, window_bounds = array<i64: 1, 256>}, {pipeline_mode = #tpu.pipeline_mode<synchronous>, transform_indices = @transform_5, window_bounds = array<i64: 1, 256>}, {pipeline_mode = #tpu.pipeline_mode<synchronous>, transform_indices = @transform_6, window_bounds = array<i64: 1, 1>}, {transform_indices = @transform_7, window_bounds = array<i64: 8, 1>}]} {
    %c0_i32 = arith.constant 0 : i32
    %0 = arith.cmpi eq, %arg1, %c0_i32 : i32
    %1 = arith.extui %0 : i1 to i32
    %c0_i32_0 = arith.constant 0 : i32
    %2 = arith.cmpi ne, %1, %c0_i32_0 : i32
    scf.if %2 {
      %cst_10 = arith.constant 0.000000e+00 : f32
      %13 = vector.broadcast %cst_10 : f32 to vector<8x128xf32>
      %c0_11 = arith.constant 0 : index
      %c0_12 = arith.constant 0 : index
      %14 = vector.load %arg10[%c0_11, %c0_12] : memref<8x128xf32, #tpu.memory_space<vmem>>, vector<8x128xf32>
      tpu.vector_store %arg10[%c0_11, %c0_12], %13 {strides = array<i32>} : memref<8x128xf32, #tpu.memory_space<vmem>>, vector<8x128xf32>,
    } else {
    }
    %c0 = arith.constant 0 : index
    %c0_1 = arith.constant 0 : index
    %3 = vector.load %arg2[%c0, %c0_1] : memref<8x32xf32, #tpu.memory_space<vmem>>, vector<8x32xf32>
    %4 = arith.truncf %3 : vector<8x32xf32> to vector<8x32xbf16>
    %c0_2 = arith.constant 0 : index
    %c0_3 = arith.constant 0 : index
    %5 = vector.load %arg10[%c0_2, %c0_3] : memref<8x128xf32, #tpu.memory_space<vmem>>, vector<8x128xf32>
    %c0_4 = arith.constant 0 : index
    %c0_5 = arith.constant 0 : index
    %6 = vector.load %arg3[%c0_4, %c0_5] : memref<32x128xbf16, #tpu.memory_space<vmem>>, vector<32x128xbf16>
    %cst = arith.constant dense<0.000000e+00> : vector<8x128xf32>
    %7 = tpu.matmul %4, %6, %cst {dimension_numbers = #tpu.dot_dimension_numbers<[1], [0], [0], [1], [0, 0, 1, 1], [], []>} : vector<8x32xbf16>, vector<32x128xbf16>, vector<8x128xf32> -> vector<8x128xf32>
    %8 = arith.addf %5, %7 : vector<8x128xf32>
    %c0_6 = arith.constant 0 : index
    %c0_7 = arith.constant 0 : index
    %9 = vector.load %arg10[%c0_6, %c0_7] : memref<8x128xf32, #tpu.memory_space<vmem>>, vector<8x128xf32>
    tpu.vector_store %arg10[%c0_6, %c0_7], %8 {strides = array<i32>} : memref<8x128xf32, #tpu.memory_space<vmem>>, vector<8x128xf32>,
    %c0_i32_8 = arith.constant 0 : i32
    %10 = arith.cmpi eq, %arg1, %c0_i32_8 : i32
    %11 = arith.extui %10 : i1 to i32
    %c0_i32_9 = arith.constant 0 : i32
    %12 = arith.cmpi ne, %11, %c0_i32_9 : i32
    scf.if %12 {
      %c0_10 = arith.constant 0 : index
      %c0_11 = arith.constant 0 : index
      %13 = vector.load %arg10[%c0_10, %c0_11] : memref<8x128xf32, #tpu.memory_space<vmem>>, vector<8x128xf32>
      %c0_12 = arith.constant 0 : index
      %c0_13 = arith.constant 0 : index
      %14 = vector.load %arg4[%c0_12, %c0_13] : memref<1x128xf32, #tpu.memory_space<vmem>>, vector<1x128xf32>
      %15 = vector.broadcast %14 : vector<1x128xf32> to vector<8x128xf32>
      %16 = arith.addf %13, %15 : vector<8x128xf32>
      %cst_14 = arith.constant 0.000000e+00 : f32
      %17 = vector.broadcast %cst_14 : f32 to vector<8x128xf32>
      %18 = arith.maximumf %16, %17 : vector<8x128xf32>
      %19 = arith.truncf %18 : vector<8x128xf32> to vector<8x128xbf16>
      %c0_15 = arith.constant 0 : index
      %c0_16 = arith.constant 0 : index
      %20 = vector.load %arg5[%c0_15, %c0_16] : memref<128x256xbf16, #tpu.memory_space<vmem>>, vector<128x256xbf16>
      %cst_17 = arith.constant dense<0.000000e+00> : vector<8x256xf32>
      %21 = tpu.matmul %19, %20, %cst_17 {dimension_numbers = #tpu.dot_dimension_numbers<[1], [0], [0], [1], [0, 0, 1, 1], [], []>} : vector<8x128xbf16>, vector<128x256xbf16>, vector<8x256xf32> -> vector<8x256xf32>
      %c0_18 = arith.constant 0 : index
      %c0_19 = arith.constant 0 : index
      %22 = vector.load %arg6[%c0_18, %c0_19] : memref<1x256xf32, #tpu.memory_space<vmem>>, vector<1x256xf32>
      %23 = vector.broadcast %22 : vector<1x256xf32> to vector<8x256xf32>
      %24 = arith.addf %21, %23 : vector<8x256xf32>
      %cst_20 = arith.constant 0.000000e+00 : f32
      %25 = vector.broadcast %cst_20 : f32 to vector<8x256xf32>
      %26 = arith.maximumf %24, %25 : vector<8x256xf32>
      %c0_21 = arith.constant 0 : index
      %c0_22 = arith.constant 0 : index
      %27 = vector.load %arg7[%c0_21, %c0_22] : memref<1x256xf32, #tpu.memory_space<vmem>>, vector<1x256xf32>
      %28 = vector.broadcast %27 : vector<1x256xf32> to vector<8x256xf32>
      %29 = arith.mulf %26, %28 : vector<8x256xf32>
      %cst_23 = arith.constant dense<0.000000e+00> : vector<8xf32>
      %30 = vector.multi_reduction <add>, %29, %cst_23 [1] : vector<8x256xf32> to vector<8xf32>
      %31 = vector.shape_cast %30 : vector<8xf32> to vector<8x1xf32>
      %c0_24 = arith.constant 0 : index
      %c0_25 = arith.constant 0 : index
      %32 = vector.load %arg8[%c0_24, %c0_25] : memref<1x1xf32, #tpu.memory_space<vmem>>, vector<1x1xf32>
      %33 = vector.broadcast %32 : vector<1x1xf32> to vector<8x1xf32>
      %34 = arith.addf %31, %33 : vector<8x1xf32>
      %c0_26 = arith.constant 0 : index
      %c0_27 = arith.constant 0 : index
      %35 = vector.load %arg9[%c0_26, %c0_27] : memref<8x1xf32, #tpu.memory_space<vmem>>, vector<8x1xf32>
      tpu.vector_store %arg9[%c0_26, %c0_27], %34 {strides = array<i32>} : memref<8x1xf32, #tpu.memory_space<vmem>>, vector<8x1xf32>,
    } else {
    }
    return
  }
  func.func @transform_0(%arg0: i32, %arg1: i32) -> (i32, i32) {
    %c0_i32 = arith.constant 0 : i32
    return %arg0, %arg1 : i32, i32
  }
  func.func @transform_1(%arg0: i32, %arg1: i32) -> (i32, i32) {
    %c0_i32 = arith.constant 0 : i32
    %c0_i32_0 = arith.constant 0 : i32
    %c0_i32_1 = arith.constant 0 : i32
    return %c0_i32, %c0_i32_0 : i32, i32
  }
  func.func @transform_2(%arg0: i32, %arg1: i32) -> (i32, i32) {
    %c0_i32 = arith.constant 0 : i32
    %c0_i32_0 = arith.constant 0 : i32
    %c0_i32_1 = arith.constant 0 : i32
    return %c0_i32, %c0_i32_0 : i32, i32
  }
  func.func @transform_3(%arg0: i32, %arg1: i32) -> (i32, i32) {
    %c0_i32 = arith.constant 0 : i32
    %c0_i32_0 = arith.constant 0 : i32
    %c0_i32_1 = arith.constant 0 : i32
    return %c0_i32, %c0_i32_0 : i32, i32
  }
  func.func @transform_4(%arg0: i32, %arg1: i32) -> (i32, i32) {
    %c0_i32 = arith.constant 0 : i32
    %c0_i32_0 = arith.constant 0 : i32
    %c0_i32_1 = arith.constant 0 : i32
    return %c0_i32, %c0_i32_0 : i32, i32
  }
  func.func @transform_5(%arg0: i32, %arg1: i32) -> (i32, i32) {
    %c0_i32 = arith.constant 0 : i32
    %c0_i32_0 = arith.constant 0 : i32
    %c0_i32_1 = arith.constant 0 : i32
    return %c0_i32, %c0_i32_0 : i32, i32
  }
  func.func @transform_6(%arg0: i32, %arg1: i32) -> (i32, i32) {
    %c0_i32 = arith.constant 0 : i32
    %c0_i32_0 = arith.constant 0 : i32
    %c0_i32_1 = arith.constant 0 : i32
    return %c0_i32, %c0_i32_0 : i32, i32
  }
  func.func @transform_7(%arg0: i32, %arg1: i32) -> (i32, i32) {
    %c0_i32 = arith.constant 0 : i32
    %c0_i32_0 = arith.constant 0 : i32
    return %arg0, %c0_i32 : i32, i32
  }
}

</mosaic_0001>

<llo_original>
// kernel: critic_forward.1
$region0: #{critic_forward.1}
  #allocation0 [shape = 'u32[]', space=smem, size = 0x4, offset = 0x4, fixed_abs, tag = 'smem constant byte address 0x4 - core index']
  #allocation1 [shape = 'u32[144,128]{1,0:T(1,128)}', space=vmem, size = 0x12000, scoped, tag = 'internal scratch']
  #allocation2 [shape = 'f32[8,128]{1,0:T(8,128)}', space=vmem, size = 0x1000, scoped, tag = 'scratch operand']
  #allocation3 [shape = 'f32[1,1]{1,0:T(1,128)S(1)}', space=vmem, size = 0x200, scoped, tag = 'scoped memory for critic_forward.1']
  %s0 = inlined_call_operand.vmem [shape: f32[8,32], index: 0, kind: input, shape index: {}]
  %s1 = inlined_call_operand.vmem [shape: bf16[32,128], index: 1, kind: input, shape index: {}]
  %s2 = inlined_call_operand.vmem [shape: f32[1,128], index: 2, kind: input, shape index: {}]
  %s3 = inlined_call_operand.vmem [shape: bf16[128,256], index: 3, kind: input, shape index: {}]
  %s4 = inlined_call_operand.vmem [shape: f32[1,256], index: 4, kind: input, shape index: {}]
  %s5 = inlined_call_operand.vmem [shape: f32[1,256], index: 5, kind: input, shape index: {}]
  %s6 = inlined_call_operand.<no memory space> [shape: f32[1,1], index: 6, kind: input, shape index: {}]
  %s7 = inlined_call_operand.vmem [shape: f32[8,1], index: 7, kind: output, shape index: {}]
  %s8 = sld [smem:[#allocation0]]
  $region46: #{critic_forward.1} parent=0
    _
  %s10 = ssub.s32 1, %s8
  %s11 = scalar_select 0, %s10, %s8
  %v12 = vstv %s6
  %13 = vst [vmem:[#allocation3] sm:$0x1] %v12
  // Predicated region
  $region2: #{critic_forward.1} parent=0 // pred_check
    _
  $region3: #{critic_forward.1} parent=0 // pred_check_branch
    %15 = sbr.rel (0) target = $region5
  $region4: #{critic_forward.1} parent=0 // pred_region
    _
  $region5: #{critic_forward.1} parent=0 // pred_fallthru
    _
  // Predicated region
  $region6: #{critic_forward.1} parent=0 // pred_check
    _
  $region7: #{critic_forward.1} parent=0 // pred_check_branch
    %17 = sbr.rel (0) target = $region9
  $region8: #{critic_forward.1} parent=0 // pred_region
    _
  $region9: #{critic_forward.1} parent=0 // pred_fallthru
    _
  // Predicated region
  $region10: #{critic_forward.1} parent=0 // pred_check
    _
  $region11: #{critic_forward.1} parent=0 // pred_check_branch
    %19 = sbr.rel (0) target = $region13
  $region12: #{critic_forward.1} parent=0 // pred_region
    _
  $region13: #{critic_forward.1} parent=0 // pred_fallthru
    _
  // Predicated region
  $region14: #{critic_forward.1} parent=0 // pred_check
    _
  $region15: #{critic_forward.1} parent=0 // pred_check_branch
    %21 = sbr.rel (0) target = $region17
  $region16: #{critic_forward.1} parent=0 // pred_region
    _
  $region17: #{critic_forward.1} parent=0 // pred_fallthru
    _
  // Predicated region
  $region18: #{critic_forward.1} parent=0 // pred_check
    _
  $region19: #{critic_forward.1} parent=0 // pred_check_branch
    %23 = sbr.rel (0) target = $region21
  $region20: #{critic_forward.1} parent=0 // pred_region
    _
  $region21: #{critic_forward.1} parent=0 // pred_fallthru
    _
  // Predicated region
  $region22: #{critic_forward.1} parent=0 // pred_check
    _
  $region23: #{critic_forward.1} parent=0 // pred_check_branch
    %25 = sbr.rel (0) target = $region25
  $region24: #{critic_forward.1} parent=0 // pred_region
    _
  $region25: #{critic_forward.1} parent=0 // pred_fallthru
    _
  // Predicated region
  $region26: #{critic_forward.1} parent=0 // pred_check
    _
  $region27: #{critic_forward.1} parent=0 // pred_check_branch
    %27 = sbr.rel (0) target = $region29
  $region28: #{critic_forward.1} parent=0 // pred_region
    _
  $region29: #{critic_forward.1} parent=0 // pred_fallthru
    _
  %p29 = scmp.eq.s32.totalorder 0, 0
  // Predicated region
  $region30: #{critic_forward.1} parent=0 // pred_check
    %p30 = pneg %p29
  $region31: #{critic_forward.1} parent=0 // pred_check_branch
    %32 = sbr.rel (%p30) target = $region33
  $region32: #{critic_forward.1} parent=0 // pred_region
    %33 = vst [vmem:[#allocation2] sm:$0xff] 0.0
  $region33: #{critic_forward.1} parent=0 // pred_fallthru
    _
  %v34 = vld [vmem:[%s0] sm:$0xff]
  %v35 = vpack.c.bf16 %v34, %v34
  %v36 = vld [vmem:[#allocation2] sm:$0xff]
  %v37 = vld [vmem:[%s1] sm:$0xf]
  %v38 = vld [vmem:[%s1 + $0x4] sm:$0xf]
  %v39 = vld [vmem:[%s1 + $0x8] sm:$0xf]
  %v40 = vld [vmem:[%s1 + $0xc] sm:$0xf]
  %v45 = vunpack.c.l.b16 %v37
  %v46 = vunpack.c.l.b16 %v38
  %v47 = vunpack.c.l.b16 %v39
  %v48 = vunpack.c.l.b16 %v40
  %v49 = vpack.c.b16 %v46, %v45
  %v50 = vpack.c.b16 %v48, %v47
  %vm53 = vcmask 261120
  %v55 = vsel %vm53, %v35, 0
  %57 = vmatprep.subr.bf16.mxu0 0
  %58 = vmatpush1.bf16.msra.mxu0 0
  %59 = vmatprep.subr.bf16.mxu0 0
  %60 = vmatpush1.bf16.msra.mxu0 0
  %61 = vmatprep.subr.bf16.mxu0 0
  %62 = vmatpush1.bf16.msra.mxu0 0
  %63 = vmatprep.subr.bf16.mxu0 0
  %64 = vmatpush1.bf16.msra.mxu0 0
  %65 = vmatprep.subr.bf16.mxu0 0
  %66 = vmatpush1.bf16.msra.mxu0 0
  %67 = vmatprep.subr.bf16.mxu0 0
  %68 = vmatpush1.bf16.msra.mxu0 0
  %69 = vmatprep.subr.bf16.mxu0 0
  %70 = vmatpush1.bf16.msra.mxu0 %v50
  %71 = vmatprep.subr.bf16.mxu0 0
  %72 = vmatpush1.bf16.msra.mxu0 %v49
  %73 = vmatprep.subr.bf16.mxu0 0
  %74 = vmatpush2.bf16.msra.mxu0 0
  %75 = vmatprep.subr.bf16.mxu0 0
  %76 = vmatpush2.bf16.msra.mxu0 0
  %77 = vmatprep.subr.bf16.mxu0 0
  %78 = vmatpush2.bf16.msra.mxu0 0
  %79 = vmatprep.subr.bf16.mxu0 0
  %80 = vmatpush2.bf16.msra.mxu0 0
  %81 = vmatprep.subr.bf16.mxu0 0
  %82 = vmatpush2.bf16.msra.mxu0 0
  %83 = vmatprep.subr.bf16.mxu0 0
  %84 = vmatpush2.bf16.msra.mxu0 0
  %85 = vmatprep.subr.bf16.mxu0 0
  %86 = vmatpush2.bf16.msra.mxu0 0
  %87 = vmatprep.subr.bf16.mxu0 0
  %88 = vmatpush2.bf16.msra.mxu0 0
  %89 = vmatprep.mubr.bf16.mxu0 0
  %90 = vmatmul.mubr.bf16.gmra.mxu0 %v55
  %v91 = vpop.f32.mrf.mxu0
  %v92 = vadd.f32 0.0, %v91
  %v93 = vpop.f32.mrf.mxu0
  %v94 = vpop.f32.mrf.mxu0
  %v95 = vpop.f32.mrf.mxu0
  %96 = vdwg.mxu0
  %v97 = vadd.f32 %v36, %v92
  %98 = vst [vmem:[#allocation2] sm:$0xff] %v97
  // Predicated region
  $region34: #{critic_forward.1} parent=0 // pred_check
    %p99 = pneg %p29
  $region35: #{critic_forward.1} parent=0 // pred_check_branch
    %101 = sbr.rel (%p99) target = $region37
  $region36: #{critic_forward.1} parent=0 // pred_region
    %v102 = vld [vmem:[#allocation2] sm:$0xff]
    %v103 = vld [vmem:[%s2] sm:$0x1]
    %v105 = vlaneseq
    %v106 = vshrl.u32 %v105, 7
    %v107 = vsub.s32 0, %v106
    %v108 = vrot.slane %v103, %v107
    %v110 = vadd.f32 %v102, %v108
    %v111 = vmax.f32 %v110, 0.0
    %v112 = vpack.c.bf16 %v111, %v111
    %v113 = vld [vmem:[%s3] sm:$0xff]
    %v114 = vld [vmem:[%s3 + $0x8] sm:$0xff]
    %v115 = vld [vmem:[%s3 + $0x10] sm:$0xff]
    %v116 = vld [vmem:[%s3 + $0x18] sm:$0xff]
    %v117 = vld [vmem:[%s3 + $0x20] sm:$0xff]
    %v118 = vld [vmem:[%s3 + $0x28] sm:$0xff]
    %v119 = vld [vmem:[%s3 + $0x30] sm:$0xff]
    %v120 = vld [vmem:[%s3 + $0x38] sm:$0xff]
    %v121 = vld [vmem:[%s3 + $0x40] sm:$0xff]
    %v122 = vld [vmem:[%s3 + $0x48] sm:$0xff]
    %v123 = vld [vmem:[%s3 + $0x50] sm:$0xff]
    %v124 = vld [vmem:[%s3 + $0x58] sm:$0xff]
    %v125 = vld [vmem:[%s3 + $0x60] sm:$0xff]
    %v126 = vld [vmem:[%s3 + $0x68] sm:$0xff]
    %v127 = vld [vmem:[%s3 + $0x70] sm:$0xff]
    %v128 = vld [vmem:[%s3 + $0x78] sm:$0xff]
    %v129 = vld [vmem:[%s4] sm:$0x3]
    %v131 = vlaneseq
    %v132 = vshrl.u32 %v131, 7
    %v133 = vsub.s32 0, %v132
    %v134 = vrot.slane %v129, %v133
    %v135 = vlaneseq
    %v136 = vshrl.u32 %v135, 7
    %v137 = vsub.s32 1, %v136
    %v138 = vrot.slane %v129, %v137
    %v157 = vunpack.c.l.b16 %v113
    %v158 = vunpack.c.h.b16 %v113
    %v159 = vunpack.c.l.b16 %v114
    %v160 = vunpack.c.h.b16 %v114
    %v161 = vunpack.c.l.b16 %v115
    %v162 = vunpack.c.h.b16 %v115
    %v163 = vunpack.c.l.b16 %v116
    %v164 = vunpack.c.h.b16 %v116
    %v165 = vunpack.c.l.b16 %v117
    %v166 = vunpack.c.h.b16 %v117
    %v167 = vunpack.c.l.b16 %v118
    %v168 = vunpack.c.h.b16 %v118
    %v169 = vunpack.c.l.b16 %v119
    %v170 = vunpack.c.h.b16 %v119
    %v171 = vunpack.c.l.b16 %v120
    %v172 = vunpack.c.h.b16 %v120
    %v173 = vunpack.c.l.b16 %v121
    %v174 = vunpack.c.h.b16 %v121
    %v175 = vunpack.c.l.b16 %v122
    %v176 = vunpack.c.h.b16 %v122
    %v177 = vunpack.c.l.b16 %v123
    %v178 = vunpack.c.h.b16 %v123
    %v179 = vunpack.c.l.b16 %v124
    %v180 = vunpack.c.h.b16 %v124
    %v181 = vunpack.c.l.b16 %v125
    %v182 = vunpack.c.h.b16 %v125
    %v183 = vunpack.c.l.b16 %v126
    %v184 = vunpack.c.h.b16 %v126
    %v185 = vunpack.c.l.b16 %v127
    %v186 = vunpack.c.h.b16 %v127
    %v187 = vunpack.c.l.b16 %v128
    %v188 = vunpack.c.h.b16 %v128
    %v189 = vpack.c.b16 %v159, %v157
    %v190 = vpack.c.b16 %v160, %v158
    %v191 = vpack.c.b16 %v163, %v161
    %v192 = vpack.c.b16 %v164, %v162
    %v193 = vpack.c.b16 %v167, %v165
    %v194 = vpack.c.b16 %v168, %v166
    %v195 = vpack.c.b16 %v171, %v169
    %v196 = vpack.c.b16 %v172, %v170
    %v197 = vpack.c.b16 %v175, %v173
    %v198 = vpack.c.b16 %v176, %v174
    %v199 = vpack.c.b16 %v179, %v177
    %v200 = vpack.c.b16 %v180, %v178
    %v201 = vpack.c.b16 %v183, %v181
    %v202 = vpack.c.b16 %v184, %v182
    %v203 = vpack.c.b16 %v187, %v185
    %v204 = vpack.c.b16 %v188, %v186
    %221 = vmatprep.subr.bf16.mxu0 %v204
    %222 = vmatpush1.bf16.msra.mxu0 %v203
    %223 = vmatprep.subr.bf16.mxu0 %v202
    %224 = vmatpush1.bf16.msra.mxu0 %v201
    %225 = vmatprep.subr.bf16.mxu0 %v200
    %226 = vmatpush1.bf16.msra.mxu0 %v199
    %227 = vmatprep.subr.bf16.mxu0 %v198
    %228 = vmatpush1.bf16.msra.mxu0 %v197
    %229 = vmatprep.subr.bf16.mxu0 %v196
    %230 = vmatpush1.bf16.msra.mxu0 %v195
    %231 = vmatprep.subr.bf16.mxu0 %v194
    %232 = vmatpush1.bf16.msra.mxu0 %v193
    %233 = vmatprep.subr.bf16.mxu0 %v192
    %234 = vmatpush1.bf16.msra.mxu0 %v191
    %235 = vmatprep.subr.bf16.mxu0 %v190
    %236 = vmatpush1.bf16.msra.mxu0 %v189
    %237 = vmatprep.subr.bf16.mxu0 0
    %238 = vmatpush2.bf16.msra.mxu0 0
    %239 = vmatprep.subr.bf16.mxu0 0
    %240 = vmatpush2.bf16.msra.mxu0 0
    %241 = vmatprep.subr.bf16.mxu0 0
    %242 = vmatpush2.bf16.msra.mxu0 0
    %243 = vmatprep.subr.bf16.mxu0 0
    %244 = vmatpush2.bf16.msra.mxu0 0
    %245 = vmatprep.subr.bf16.mxu0 0
    %246 = vmatpush2.bf16.msra.mxu0 0
    %247 = vmatprep.subr.bf16.mxu0 0
    %248 = vmatpush2.bf16.msra.mxu0 0
    %249 = vmatprep.subr.bf16.mxu0 0
    %250 = vmatpush2.bf16.msra.mxu0 0
    %251 = vmatprep.subr.bf16.mxu0 0
    %252 = vmatpush2.bf16.msra.mxu0 0
    %253 = vmatprep.mubr.bf16.mxu0 0
    %254 = vmatmul.mubr.bf16.gmra.mxu0 %v112
    %v255 = vpop.f32.mrf.mxu0
    %v256 = vadd.f32 %v134, %v255
    %v257 = vpop.f32.mrf.mxu0
    %v258 = vadd.f32 %v138, %v257
    %v259 = vpop.f32.mrf.mxu0
    %v260 = vpop.f32.mrf.mxu0
    %261 = vdwg.mxu0
    %v262 = vmax.f32 %v256, 0.0
    %v263 = vmax.f32 %v258, 0.0
    %v264 = vld [vmem:[%s5] sm:$0x3]
    %v266 = vlaneseq
    %v267 = vshrl.u32 %v266, 7
    %v268 = vsub.s32 0, %v267
    %v269 = vrot.slane %v264, %v268
    %v270 = vlaneseq
    %v271 = vshrl.u32 %v270, 7
    %v272 = vsub.s32 1, %v271
    %v273 = vrot.slane %v264, %v272
    %v276 = vmul.f32 %v262, %v269
    %v277 = vmul.f32 %v263, %v273
    %v278 = vadd.f32 %v276, %v277
    %279 = vadd.xlane.f32.xlu0 %v278
    %v280 = vpop.xlane.xlu0 %279
    %v281 = vld [vmem:[#allocation3] sm:$0x1]
    %v283 = vlaneseq
    %v284 = vshrl.u32 %v283, 7
    %v285 = vsub.s32 0, %v284
    %v286 = vrot.slane %v281, %v285
    %v288 = vadd.f32 %v280, %v286
    %vm289 = vcmask 7168
    %290 = vst.msk [vmem:[%s7] sm:$0xff] %vm289, %v288
  $region37: #{critic_forward.1} parent=0 // pred_fallthru
    _
  // Predicated region
  $region38: #{critic_forward.1} parent=0 // pred_check
    _
  $region39: #{critic_forward.1} parent=0 // pred_check_branch
    %292 = sbr.rel (0) target = $region41
  $region40: #{critic_forward.1} parent=0 // pred_region
    _
  $region41: #{critic_forward.1} parent=0 // pred_fallthru
    _
  // Predicated region
  $region42: #{critic_forward.1} parent=0 // pred_check
    _
  $region43: #{critic_forward.1} parent=0 // pred_check_branch
    %294 = sbr.rel (0) target = $region45
  $region44: #{critic_forward.1} parent=0 // pred_region
    _
  $region45: #{critic_forward.1} parent=0 // pred_fallthru
    _

</llo_original>
